<compile_context>
chip_gen: v5e
topology: v5e:2x2
jax: 0.10.0
libtpu: 0.0.40
codegen_flags: <defaults>
</compile_context>

<pallas_src>
import functools

import jax
import jax.numpy as jnp
from jax.experimental import pallas as pl
from jax.experimental.pallas import tpu as pltpu


# ----------------------------------------------------------------------------
# Fused kernel: (conv3x3 + BN affine + ReLU) x 3, intermediates VMEM-resident
# ----------------------------------------------------------------------------
def _conv_bn_relu(src_ref, H, W, P, w_ref, s_ref, b_ref):
    """One Conv2d(3x3, pad=1, bias=False) + folded-BN affine + ReLU.

    src_ref : (C, (H+3)*P) ref holding the activation in a zero-padded "flat
              frame": original pixel (h, w) lives at flat column (h+1)*P+(w+1),
              where P = W + 2.
    Returns y : (Cout, H*P) f32.  Column j = h*P + w holds the conv output at
              (h, w) for w < W; columns with w in {W, W+1} are garbage and are
              masked by the caller before being written back to the flat frame.
    """
    HP = H * P
    taps = []
    for dy in range(3):
        for dx in range(3):
            off = dy * P + dx
            taps.append(src_ref[:, off:off + HP])          # (C, H*P) shifted view
    patches = jnp.concatenate(taps, axis=0)                # (9*C, H*P) im2col
    y = jnp.dot(w_ref[...], patches, preferred_element_type=jnp.float32)
    y = y * s_ref[...] + b_ref[...]                        # BN (eval, folded)
    return jnp.maximum(y, 0.0)                             # ReLU


def triple_conv_kernel(x_ref, mask_ref,
                       w1_ref, s1_ref, b1_ref,
                       w2_ref, s2_ref, b2_ref,
                       w3_ref, s3_ref, b3_ref,
                       o_ref, act_ref, *, H, W):
    # x_ref   : (Cin, (H+3)*(W+2))   zero-padded, flattened input frame
    # mask_ref: (1, H*(W+2))         1.0 on valid columns (w < W), else 0.0
    # wK_ref  : (Cout, 9*C_block)    im2col-packed conv weights
    # sK/bK   : (Cout, 1)            folded BatchNorm scale / bias
    # o_ref   : (Cout, H*(W+2))      lane-dense output (wrapper strips w >= W)
    # act_ref : (Cout, (H+3)*(W+2))  VMEM scratch for block-1/2 activations
    P = W + 2
    HP = H * P
    write_lo = P + 1                                       # flat index of (1, 1)
    mask = mask_ref[...]

    # zero the scratch so the halo of the flat frame is zero-padding
    act_ref[...] = jnp.zeros(act_ref.shape, act_ref.dtype)

    y1 = _conv_bn_relu(x_ref, H, W, P, w1_ref, s1_ref, b1_ref)
    act_ref[:, write_lo:write_lo + HP] = y1 * mask

    y2 = _conv_bn_relu(act_ref, H, W, P, w2_ref, s2_ref, b2_ref)
    act_ref[:, write_lo:write_lo + HP] = y2 * mask

    y3 = _conv_bn_relu(act_ref, H, W, P, w3_ref, s3_ref, b3_ref)
    o_ref[...] = y3.astype(o_ref.dtype)


def triple2dconv_pallas_impl(x_nchw, p1, p2, p3):
    N, Cin, H, W = x_nchw.shape
    Cout = p1["w_mat"].shape[0]
    P = W + 2
    L = (H + 3) * P
    HP = H * P

    # Zero-pad the *input* once into the flat frame layout
    # (intermediate activations are re-padded purely inside VMEM).
    xp = jnp.pad(x_nchw, ((0, 0), (0, 0), (1, 2), (1, 1))).reshape(N, Cin, L)

    # valid-column mask: 1.0 where w < W inside each padded row of width P
    mask = (jnp.arange(P, dtype=jnp.int32) < W).astype(jnp.float32)
    mask = jnp.broadcast_to(mask, (H, P)).reshape(1, HP)

    kernel = functools.partial(triple_conv_kernel, H=H, W=W)

    def full(shape):
        return pl.BlockSpec(shape, lambda n, _s=shape: (0,) * len(_s))

    out = pl.pallas_call(
        kernel,
        out_shape=jax.ShapeDtypeStruct((N, Cout, HP), x_nchw.dtype),
        grid=(N,),
        in_specs=[
            pl.BlockSpec((None, Cin, L), lambda n: (n, 0, 0)),
            full((1, HP)),
            full((Cout, 9 * Cin)), full((Cout, 1)), full((Cout, 1)),
            full((Cout, 9 * Cout)), full((Cout, 1)), full((Cout, 1)),
            full((Cout, 9 * Cout)), full((Cout, 1)), full((Cout, 1)),
        ],
        out_specs=pl.BlockSpec((None, Cout, HP), lambda n: (n, 0, 0)),
        scratch_shapes=[pltpu.VMEM((Cout, L), jnp.float32)],
        compiler_params=pltpu.CompilerParams(
            dimension_semantics=("parallel",)),
    )(xp, mask,
      p1["w_mat"], p1["scale"], p1["bias"],
      p2["w_mat"], p2["scale"], p2["bias"],
      p3["w_mat"], p3["scale"], p3["bias"])

    # strip the 2 garbage columns per row: (N, Cout, H, P) -> NCHW (..., W)
    return out.reshape(N, Cout, H, P)[:, :, :, :W]


triple2dconv_pallas = jax.jit(triple2dconv_pallas_impl)


# ----------------------------------------------------------------------------
# Parameter construction (deterministic, in-script)
# ----------------------------------------------------------------------------
def make_block_params(key, in_dim, out_dim, eps=1e-5):
    kw, kg, kb, km, kv = jax.random.split(key, 5)
    # Conv2d weight in PyTorch layout (Cout, Cin, 3, 3)
    w_oihw = 0.1 * jax.random.normal(kw, (out_dim, in_dim, 3, 3), jnp.float32)
    gamma = 1.0 + 0.1 * jax.random.normal(kg, (out_dim,), jnp.float32)
    beta = 0.1 * jax.random.normal(kb, (out_dim,), jnp.float32)
    running_mean = 0.1 * jax.random.normal(km, (out_dim,), jnp.float32)
    running_var = 1.0 + 0.05 * jnp.abs(jax.random.normal(kv, (out_dim,), jnp.float32))

    scale = gamma / jnp.sqrt(running_var + eps)
    bias = beta - running_mean * scale
    # im2col weight layout: (Cout, ky, kx, Cin) -> (Cout, 9*Cin),
    # column index = (ky*3 + kx)*Cin + cin  (matches in-kernel tap concat order)
    w_mat = jnp.transpose(w_oihw, (0, 2, 3, 1)).reshape(out_dim, 9 * in_dim)
    return dict(
        w_oihw=w_oihw,
        w_mat=w_mat,
        scale=scale.reshape(out_dim, 1),
        bias=bias.reshape(out_dim, 1),
    )


# ----------------------------------------------------------------------------
# Pure-JAX reference (for correctness check)
# ----------------------------------------------------------------------------
def ref_block(x_nchw, p):
    y = jax.lax.conv_general_dilated(
        x_nchw, p["w_oihw"], window_strides=(1, 1), padding="SAME",
        dimension_numbers=("NCHW", "OIHW", "NCHW"),
    )
    s = p["scale"].reshape(1, -1, 1, 1)
    b = p["bias"].reshape(1, -1, 1, 1)
    return jnp.maximum(y * s + b, 0.0)


def triple2dconv_ref(x_nchw, p1, p2, p3):
    x = ref_block(x_nchw, p1)
    x = ref_block(x, p2)
    x = ref_block(x, p3)
    return x


# ----------------------------------------------------------------------------
if __name__ == "__main__":
    in_dim, out_dim = 4, 8
    N, H, W = 2, 16, 16

    root = jax.random.PRNGKey(0)
    kx, k1, k2, k3 = jax.random.split(root, 4)

    x = jax.random.normal(kx, (N, in_dim, H, W), jnp.float32)  # NCHW input
    p1 = make_block_params(k1, in_dim, out_dim)
    p2 = make_block_params(k2, out_dim, out_dim)
    p3 = make_block_params(k3, out_dim, out_dim)

    out = triple2dconv_pallas(x, p1, p2, p3)
    out = jax.block_until_ready(out)

    ref = jax.block_until_ready(triple2dconv_ref(x, p1, p2, p3))
    assert out.shape == (N, out_dim, H, W), out.shape
    assert jnp.allclose(out, ref, rtol=1e-4, atol=1e-4), float(
        jnp.max(jnp.abs(out - ref))
    )

    print("KERNEL_OK")
</pallas_src>

<mosaic_0001>
module attributes {stable_mosaic.version = 11 : i64} {
  func.func @triple_conv_kernel(%arg0: i32, %arg1: memref<1x4x342xf32, #tpu.memory_space<vmem>>, %arg2: memref<1x288xf32, #tpu.memory_space<vmem>>, %arg3: memref<8x36xf32, #tpu.memory_space<vmem>>, %arg4: memref<8x1xf32, #tpu.memory_space<vmem>>, %arg5: memref<8x1xf32, #tpu.memory_space<vmem>>, %arg6: memref<8x72xf32, #tpu.memory_space<vmem>>, %arg7: memref<8x1xf32, #tpu.memory_space<vmem>>, %arg8: memref<8x1xf32, #tpu.memory_space<vmem>>, %arg9: memref<8x72xf32, #tpu.memory_space<vmem>>, %arg10: memref<8x1xf32, #tpu.memory_space<vmem>>, %arg11: memref<8x1xf32, #tpu.memory_space<vmem>>, %arg12: memref<1x8x288xf32, #tpu.memory_space<vmem>>, %arg13: memref<8x342xf32, #tpu.memory_space<vmem>>) attributes {dimension_semantics = [#tpu.dimension_semantics<parallel>], iteration_bounds = array<i64: 2>, scalar_prefetch = 0 : i64, scratch_operands = 1 : i64, tpu.core_type = #tpu.core_type<tc>, window_params = [{transform_indices = @transform_0, window_bounds = array<i64: 1, 4, 342>}, {pipeline_mode = #tpu.pipeline_mode<synchronous>, transform_indices = @transform_1, window_bounds = array<i64: 1, 288>}, {pipeline_mode = #tpu.pipeline_mode<synchronous>, transform_indices = @transform_2, window_bounds = array<i64: 8, 36>}, {pipeline_mode = #tpu.pipeline_mode<synchronous>, transform_indices = @transform_3, window_bounds = array<i64: 8, 1>}, {pipeline_mode = #tpu.pipeline_mode<synchronous>, transform_indices = @transform_4, window_bounds = array<i64: 8, 1>}, {pipeline_mode = #tpu.pipeline_mode<synchronous>, transform_indices = @transform_5, window_bounds = array<i64: 8, 72>}, {pipeline_mode = #tpu.pipeline_mode<synchronous>, transform_indices = @transform_6, window_bounds = array<i64: 8, 1>}, {pipeline_mode = #tpu.pipeline_mode<synchronous>, transform_indices = @transform_7, window_bounds = array<i64: 8, 1>}, {pipeline_mode = #tpu.pipeline_mode<synchronous>, transform_indices = @transform_8, window_bounds = array<i64: 8, 72>}, {pipeline_mode = #tpu.pipeline_mode<synchronous>, transform_indices = @transform_9, window_bounds = array<i64: 8, 1>}, {pipeline_mode = #tpu.pipeline_mode<synchronous>, transform_indices = @transform_10, window_bounds = array<i64: 8, 1>}, {transform_indices = @transform_11, window_bounds = array<i64: 1, 8, 288>}]} {
    %c0 = arith.constant 0 : index
    %c0_0 = arith.constant 0 : index
    %0 = vector.load %arg2[%c0, %c0_0] : memref<1x288xf32, #tpu.memory_space<vmem>>, vector<1x288xf32>
    %cst = arith.constant 0.000000e+00 : f32
    %1 = vector.broadcast %cst : f32 to vector<8x342xf32>
    %c0_1 = arith.constant 0 : index
    %c0_2 = arith.constant 0 : index
    %2 = vector.load %arg13[%c0_1, %c0_2] : memref<8x342xf32, #tpu.memory_space<vmem>>, vector<8x342xf32>
    tpu.vector_store %arg13[%c0_1, %c0_2], %1 {strides = array<i32>} : memref<8x342xf32, #tpu.memory_space<vmem>>, vector<8x342xf32>,
    %c0_3 = arith.constant 0 : index
    %c0_4 = arith.constant 0 : index
    %c0_5 = arith.constant 0 : index
    %3 = vector.load %arg1[%c0_3, %c0_4, %c0_5] : memref<1x4x342xf32, #tpu.memory_space<vmem>>, vector<1x4x288xf32>
    %4 = vector.shape_cast %3 : vector<1x4x288xf32> to vector<4x288xf32>
    %c0_6 = arith.constant 0 : index
    %c0_7 = arith.constant 0 : index
    %c1 = arith.constant 1 : index
    %5 = vector.load %arg1[%c0_6, %c0_7, %c1] : memref<1x4x342xf32, #tpu.memory_space<vmem>>, vector<1x4x288xf32>
    %6 = vector.shape_cast %5 : vector<1x4x288xf32> to vector<4x288xf32>
    %c0_8 = arith.constant 0 : index
    %c0_9 = arith.constant 0 : index
    %c2 = arith.constant 2 : index
    %7 = vector.load %arg1[%c0_8, %c0_9, %c2] : memref<1x4x342xf32, #tpu.memory_space<vmem>>, vector<1x4x288xf32>
    %8 = vector.shape_cast %7 : vector<1x4x288xf32> to vector<4x288xf32>
    %c0_10 = arith.constant 0 : index
    %c0_11 = arith.constant 0 : index
    %c18 = arith.constant 18 : index
    %9 = vector.load %arg1[%c0_10, %c0_11, %c18] : memref<1x4x342xf32, #tpu.memory_space<vmem>>, vector<1x4x288xf32>
    %10 = vector.shape_cast %9 : vector<1x4x288xf32> to vector<4x288xf32>
    %c0_12 = arith.constant 0 : index
    %c0_13 = arith.constant 0 : index
    %c19 = arith.constant 19 : index
    %11 = vector.load %arg1[%c0_12, %c0_13, %c19] : memref<1x4x342xf32, #tpu.memory_space<vmem>>, vector<1x4x288xf32>
    %12 = vector.shape_cast %11 : vector<1x4x288xf32> to vector<4x288xf32>
    %c0_14 = arith.constant 0 : index
    %c0_15 = arith.constant 0 : index
    %c20 = arith.constant 20 : index
    %13 = vector.load %arg1[%c0_14, %c0_15, %c20] : memref<1x4x342xf32, #tpu.memory_space<vmem>>, vector<1x4x288xf32>
    %14 = vector.shape_cast %13 : vector<1x4x288xf32> to vector<4x288xf32>
    %c0_16 = arith.constant 0 : index
    %c0_17 = arith.constant 0 : index
    %c36 = arith.constant 36 : index
    %15 = vector.load %arg1[%c0_16, %c0_17, %c36] : memref<1x4x342xf32, #tpu.memory_space<vmem>>, vector<1x4x288xf32>
    %16 = vector.shape_cast %15 : vector<1x4x288xf32> to vector<4x288xf32>
    %c0_18 = arith.constant 0 : index
    %c0_19 = arith.constant 0 : index
    %c37 = arith.constant 37 : index
    %17 = vector.load %arg1[%c0_18, %c0_19, %c37] : memref<1x4x342xf32, #tpu.memory_space<vmem>>, vector<1x4x288xf32>
    %18 = vector.shape_cast %17 : vector<1x4x288xf32> to vector<4x288xf32>
    %c0_20 = arith.constant 0 : index
    %c0_21 = arith.constant 0 : index
    %c38 = arith.constant 38 : index
    %19 = vector.load %arg1[%c0_20, %c0_21, %c38] : memref<1x4x342xf32, #tpu.memory_space<vmem>>, vector<1x4x288xf32>
    %20 = vector.shape_cast %19 : vector<1x4x288xf32> to vector<4x288xf32>
    %21 = tpu.concatenate %4, %6, %8, %10, %12, %14, %16, %18, %20 in 0 : vector<4x288xf32>, vector<4x288xf32>, vector<4x288xf32>, vector<4x288xf32>, vector<4x288xf32>, vector<4x288xf32>, vector<4x288xf32>, vector<4x288xf32>, vector<4x288xf32> -> vector<36x288xf32>
    %c0_22 = arith.constant 0 : index
    %c0_23 = arith.constant 0 : index
    %22 = vector.load %arg3[%c0_22, %c0_23] : memref<8x36xf32, #tpu.memory_space<vmem>>, vector<8x36xf32>
    %cst_24 = arith.constant dense<0.000000e+00> : vector<8x288xf32>
    %23 = tpu.matmul %22, %21, %cst_24 {dimension_numbers = #tpu.dot_dimension_numbers<[1], [0], [0], [1], [0, 0, 1, 1], [], []>} : vector<8x36xf32>, vector<36x288xf32>, vector<8x288xf32> -> vector<8x288xf32>
    %c0_25 = arith.constant 0 : index
    %c0_26 = arith.constant 0 : index
    %24 = vector.load %arg4[%c0_25, %c0_26] : memref<8x1xf32, #tpu.memory_space<vmem>>, vector<8x1xf32>
    %25 = vector.broadcast %24 : vector<8x1xf32> to vector<8x288xf32>
    %26 = arith.mulf %23, %25 : vector<8x288xf32>
    %c0_27 = arith.constant 0 : index
    %c0_28 = arith.constant 0 : index
    %27 = vector.load %arg5[%c0_27, %c0_28] : memref<8x1xf32, #tpu.memory_space<vmem>>, vector<8x1xf32>
    %28 = vector.broadcast %27 : vector<8x1xf32> to vector<8x288xf32>
    %29 = arith.addf %26, %28 : vector<8x288xf32>
    %cst_29 = arith.constant 0.000000e+00 : f32
    %30 = vector.broadcast %cst_29 : f32 to vector<8x288xf32>
    %31 = arith.maximumf %29, %30 : vector<8x288xf32>
    %32 = vector.broadcast %0 : vector<1x288xf32> to vector<8x288xf32>
    %33 = arith.mulf %31, %32 : vector<8x288xf32>
    %c0_30 = arith.constant 0 : index
    %c19_31 = arith.constant 19 : index
    %34 = vector.load %arg13[%c0_30, %c19_31] : memref<8x342xf32, #tpu.memory_space<vmem>>, vector<8x288xf32>
    tpu.vector_store %arg13[%c0_30, %c19_31], %33 {strides = array<i32>} : memref<8x342xf32, #tpu.memory_space<vmem>>, vector<8x288xf32>,
    %c0_32 = arith.constant 0 : index
    %c0_33 = arith.constant 0 : index
    %35 = vector.load %arg13[%c0_32, %c0_33] : memref<8x342xf32, #tpu.memory_space<vmem>>, vector<8x288xf32>
    %c0_34 = arith.constant 0 : index
    %c1_35 = arith.constant 1 : index
    %36 = vector.load %arg13[%c0_34, %c1_35] : memref<8x342xf32, #tpu.memory_space<vmem>>, vector<8x288xf32>
    %c0_36 = arith.constant 0 : index
    %c2_37 = arith.constant 2 : index
    %37 = vector.load %arg13[%c0_36, %c2_37] : memref<8x342xf32, #tpu.memory_space<vmem>>, vector<8x288xf32>
    %c0_38 = arith.constant 0 : index
    %c18_39 = arith.constant 18 : index
    %38 = vector.load %arg13[%c0_38, %c18_39] : memref<8x342xf32, #tpu.memory_space<vmem>>, vector<8x288xf32>
    %c0_40 = arith.constant 0 : index
    %c19_41 = arith.constant 19 : index
    %39 = vector.load %arg13[%c0_40, %c19_41] : memref<8x342xf32, #tpu.memory_space<vmem>>, vector<8x288xf32>
    %c0_42 = arith.constant 0 : index
    %c20_43 = arith.constant 20 : index
    %40 = vector.load %arg13[%c0_42, %c20_43] : memref<8x342xf32, #tpu.memory_space<vmem>>, vector<8x288xf32>
    %c0_44 = arith.constant 0 : index
    %c36_45 = arith.constant 36 : index
    %41 = vector.load %arg13[%c0_44, %c36_45] : memref<8x342xf32, #tpu.memory_space<vmem>>, vector<8x288xf32>
    %c0_46 = arith.constant 0 : index
    %c37_47 = arith.constant 37 : index
    %42 = vector.load %arg13[%c0_46, %c37_47] : memref<8x342xf32, #tpu.memory_space<vmem>>, vector<8x288xf32>
    %c0_48 = arith.constant 0 : index
    %c38_49 = arith.constant 38 : index
    %43 = vector.load %arg13[%c0_48, %c38_49] : memref<8x342xf32, #tpu.memory_space<vmem>>, vector<8x288xf32>
    %44 = tpu.concatenate %35, %36, %37, %38, %39, %40, %41, %42, %43 in 0 : vector<8x288xf32>, vector<8x288xf32>, vector<8x288xf32>, vector<8x288xf32>, vector<8x288xf32>, vector<8x288xf32>, vector<8x288xf32>, vector<8x288xf32>, vector<8x288xf32> -> vector<72x288xf32>
    %c0_50 = arith.constant 0 : index
    %c0_51 = arith.constant 0 : index
    %45 = vector.load %arg6[%c0_50, %c0_51] : memref<8x72xf32, #tpu.memory_space<vmem>>, vector<8x72xf32>
    %cst_52 = arith.constant dense<0.000000e+00> : vector<8x288xf32>
    %46 = tpu.matmul %45, %44, %cst_52 {dimension_numbers = #tpu.dot_dimension_numbers<[1], [0], [0], [1], [0, 0, 1, 1], [], []>} : vector<8x72xf32>, vector<72x288xf32>, vector<8x288xf32> -> vector<8x288xf32>
    %c0_53 = arith.constant 0 : index
    %c0_54 = arith.constant 0 : index
    %47 = vector.load %arg7[%c0_53, %c0_54] : memref<8x1xf32, #tpu.memory_space<vmem>>, vector<8x1xf32>
    %48 = vector.broadcast %47 : vector<8x1xf32> to vector<8x288xf32>
    %49 = arith.mulf %46, %48 : vector<8x288xf32>
    %c0_55 = arith.constant 0 : index
    %c0_56 = arith.constant 0 : index
    %50 = vector.load %arg8[%c0_55, %c0_56] : memref<8x1xf32, #tpu.memory_space<vmem>>, vector<8x1xf32>
    %51 = vector.broadcast %50 : vector<8x1xf32> to vector<8x288xf32>
    %52 = arith.addf %49, %51 : vector<8x288xf32>
    %cst_57 = arith.constant 0.000000e+00 : f32
    %53 = vector.broadcast %cst_57 : f32 to vector<8x288xf32>
    %54 = arith.maximumf %52, %53 : vector<8x288xf32>
    %55 = vector.broadcast %0 : vector<1x288xf32> to vector<8x288xf32>
    %56 = arith.mulf %54, %55 : vector<8x288xf32>
    %c0_58 = arith.constant 0 : index
    %c19_59 = arith.constant 19 : index
    %57 = vector.load %arg13[%c0_58, %c19_59] : memref<8x342xf32, #tpu.memory_space<vmem>>, vector<8x288xf32>
    tpu.vector_store %arg13[%c0_58, %c19_59], %56 {strides = array<i32>} : memref<8x342xf32, #tpu.memory_space<vmem>>, vector<8x288xf32>,
    %c0_60 = arith.constant 0 : index
    %c0_61 = arith.constant 0 : index
    %58 = vector.load %arg13[%c0_60, %c0_61] : memref<8x342xf32, #tpu.memory_space<vmem>>, vector<8x288xf32>
    %c0_62 = arith.constant 0 : index
    %c1_63 = arith.constant 1 : index
    %59 = vector.load %arg13[%c0_62, %c1_63] : memref<8x342xf32, #tpu.memory_space<vmem>>, vector<8x288xf32>
    %c0_64 = arith.constant 0 : index
    %c2_65 = arith.constant 2 : index
    %60 = vector.load %arg13[%c0_64, %c2_65] : memref<8x342xf32, #tpu.memory_space<vmem>>, vector<8x288xf32>
    %c0_66 = arith.constant 0 : index
    %c18_67 = arith.constant 18 : index
    %61 = vector.load %arg13[%c0_66, %c18_67] : memref<8x342xf32, #tpu.memory_space<vmem>>, vector<8x288xf32>
    %c0_68 = arith.constant 0 : index
    %c19_69 = arith.constant 19 : index
    %62 = vector.load %arg13[%c0_68, %c19_69] : memref<8x342xf32, #tpu.memory_space<vmem>>, vector<8x288xf32>
    %c0_70 = arith.constant 0 : index
    %c20_71 = arith.constant 20 : index
    %63 = vector.load %arg13[%c0_70, %c20_71] : memref<8x342xf32, #tpu.memory_space<vmem>>, vector<8x288xf32>
    %c0_72 = arith.constant 0 : index
    %c36_73 = arith.constant 36 : index
    %64 = vector.load %arg13[%c0_72, %c36_73] : memref<8x342xf32, #tpu.memory_space<vmem>>, vector<8x288xf32>
    %c0_74 = arith.constant 0 : index
    %c37_75 = arith.constant 37 : index
    %65 = vector.load %arg13[%c0_74, %c37_75] : memref<8x342xf32, #tpu.memory_space<vmem>>, vector<8x288xf32>
    %c0_76 = arith.constant 0 : index
    %c38_77 = arith.constant 38 : index
    %66 = vector.load %arg13[%c0_76, %c38_77] : memref<8x342xf32, #tpu.memory_space<vmem>>, vector<8x288xf32>
    %67 = tpu.concatenate %58, %59, %60, %61, %62, %63, %64, %65, %66 in 0 : vector<8x288xf32>, vector<8x288xf32>, vector<8x288xf32>, vector<8x288xf32>, vector<8x288xf32>, vector<8x288xf32>, vector<8x288xf32>, vector<8x288xf32>, vector<8x288xf32> -> vector<72x288xf32>
    %c0_78 = arith.constant 0 : index
    %c0_79 = arith.constant 0 : index
    %68 = vector.load %arg9[%c0_78, %c0_79] : memref<8x72xf32, #tpu.memory_space<vmem>>, vector<8x72xf32>
    %cst_80 = arith.constant dense<0.000000e+00> : vector<8x288xf32>
    %69 = tpu.matmul %68, %67, %cst_80 {dimension_numbers = #tpu.dot_dimension_numbers<[1], [0], [0], [1], [0, 0, 1, 1], [], []>} : vector<8x72xf32>, vector<72x288xf32>, vector<8x288xf32> -> vector<8x288xf32>
    %c0_81 = arith.constant 0 : index
    %c0_82 = arith.constant 0 : index
    %70 = vector.load %arg10[%c0_81, %c0_82] : memref<8x1xf32, #tpu.memory_space<vmem>>, vector<8x1xf32>
    %71 = vector.broadcast %70 : vector<8x1xf32> to vector<8x288xf32>
    %72 = arith.mulf %69, %71 : vector<8x288xf32>
    %c0_83 = arith.constant 0 : index
    %c0_84 = arith.constant 0 : index
    %73 = vector.load %arg11[%c0_83, %c0_84] : memref<8x1xf32, #tpu.memory_space<vmem>>, vector<8x1xf32>
    %74 = vector.broadcast %73 : vector<8x1xf32> to vector<8x288xf32>
    %75 = arith.addf %72, %74 : vector<8x288xf32>
    %cst_85 = arith.constant 0.000000e+00 : f32
    %76 = vector.broadcast %cst_85 : f32 to vector<8x288xf32>
    %77 = arith.maximumf %75, %76 : vector<8x288xf32>
    %c0_86 = arith.constant 0 : index
    %c0_87 = arith.constant 0 : index
    %c0_88 = arith.constant 0 : index
    %78 = vector.load %arg12[%c0_86, %c0_87, %c0_88] : memref<1x8x288xf32, #tpu.memory_space<vmem>>, vector<1x8x288xf32>
    %79 = vector.shape_cast %78 : vector<1x8x288xf32> to vector<8x288xf32>
    %80 = vector.shape_cast %77 : vector<8x288xf32> to vector<1x8x288xf32>
    tpu.vector_store %arg12[%c0_86, %c0_87, %c0_88], %80 {strides = array<i32>} : memref<1x8x288xf32, #tpu.memory_space<vmem>>, vector<1x8x288xf32>,
    return
  }
  func.func @transform_0(%arg0: i32) -> (i32, i32, i32) {
    %c0_i32 = arith.constant 0 : i32
    %c0_i32_0 = arith.constant 0 : i32
    %c0_i32_1 = arith.constant 0 : i32
    return %arg0, %c0_i32, %c0_i32_0 : i32, i32, i32
  }
  func.func @transform_1(%arg0: i32) -> (i32, i32) {
    %c0_i32 = arith.constant 0 : i32
    %c0_i32_0 = arith.constant 0 : i32
    %c0_i32_1 = arith.constant 0 : i32
    return %c0_i32, %c0_i32_0 : i32, i32
  }
  func.func @transform_2(%arg0: i32) -> (i32, i32) {
    %c0_i32 = arith.constant 0 : i32
    %c0_i32_0 = arith.constant 0 : i32
    %c0_i32_1 = arith.constant 0 : i32
    return %c0_i32, %c0_i32_0 : i32, i32
  }
  func.func @transform_3(%arg0: i32) -> (i32, i32) {
    %c0_i32 = arith.constant 0 : i32
    %c0_i32_0 = arith.constant 0 : i32
    %c0_i32_1 = arith.constant 0 : i32
    return %c0_i32, %c0_i32_0 : i32, i32
  }
  func.func @transform_4(%arg0: i32) -> (i32, i32) {
    %c0_i32 = arith.constant 0 : i32
    %c0_i32_0 = arith.constant 0 : i32
    %c0_i32_1 = arith.constant 0 : i32
    return %c0_i32, %c0_i32_0 : i32, i32
  }
  func.func @transform_5(%arg0: i32) -> (i32, i32) {
    %c0_i32 = arith.constant 0 : i32
    %c0_i32_0 = arith.constant 0 : i32
    %c0_i32_1 = arith.constant 0 : i32
    return %c0_i32, %c0_i32_0 : i32, i32
  }
  func.func @transform_6(%arg0: i32) -> (i32, i32) {
    %c0_i32 = arith.constant 0 : i32
    %c0_i32_0 = arith.constant 0 : i32
    %c0_i32_1 = arith.constant 0 : i32
    return %c0_i32, %c0_i32_0 : i32, i32
  }
  func.func @transform_7(%arg0: i32) -> (i32, i32) {
    %c0_i32 = arith.constant 0 : i32
    %c0_i32_0 = arith.constant 0 : i32
    %c0_i32_1 = arith.constant 0 : i32
    return %c0_i32, %c0_i32_0 : i32, i32
  }
  func.func @transform_8(%arg0: i32) -> (i32, i32) {
    %c0_i32 = arith.constant 0 : i32
    %c0_i32_0 = arith.constant 0 : i32
    %c0_i32_1 = arith.constant 0 : i32
    return %c0_i32, %c0_i32_0 : i32, i32
  }
  func.func @transform_9(%arg0: i32) -> (i32, i32) {
    %c0_i32 = arith.constant 0 : i32
    %c0_i32_0 = arith.constant 0 : i32
    %c0_i32_1 = arith.constant 0 : i32
    return %c0_i32, %c0_i32_0 : i32, i32
  }
  func.func @transform_10(%arg0: i32) -> (i32, i32) {
    %c0_i32 = arith.constant 0 : i32
    %c0_i32_0 = arith.constant 0 : i32
    %c0_i32_1 = arith.constant 0 : i32
    return %c0_i32, %c0_i32_0 : i32, i32
  }
  func.func @transform_11(%arg0: i32) -> (i32, i32, i32) {
    %c0_i32 = arith.constant 0 : i32
    %c0_i32_0 = arith.constant 0 : i32
    %c0_i32_1 = arith.constant 0 : i32
    return %arg0, %c0_i32, %c0_i32_0 : i32, i32, i32
  }
}

</mosaic_0001>

<llo_original>
// kernel: triple2dconv_pallas_impl.1
$region0: #{triple2dconv_pallas_impl.1}
  #allocation0 [shape = 'u32[]', space=smem, size = 0x4, offset = 0x4, fixed_abs, tag = 'smem constant byte address 0x4 - core index']
  #allocation1 [shape = 'u32[72,128]{1,0:T(1,128)}', space=vmem, size = 0x9000, scoped, tag = 'internal scratch']
  #allocation2 [shape = 'f32[8,342]{1,0:T(8,128)}', space=vmem, size = 0x3000, scoped, tag = 'scratch operand']
  %s0 = inlined_call_operand.vmem [shape: f32[2,4,342], index: 0, kind: input, shape index: {}]
  %s1 = inlined_call_operand.vmem [shape: f32[1,288], index: 1, kind: input, shape index: {}]
  %s2 = inlined_call_operand.vmem [shape: f32[8,36], index: 2, kind: input, shape index: {}]
  %s3 = inlined_call_operand.vmem [shape: f32[8,1], index: 3, kind: input, shape index: {}]
  %s4 = inlined_call_operand.vmem [shape: f32[8,1], index: 4, kind: input, shape index: {}]
  %s5 = inlined_call_operand.vmem [shape: f32[8,72], index: 5, kind: input, shape index: {}]
  %s6 = inlined_call_operand.vmem [shape: f32[8,1], index: 6, kind: input, shape index: {}]
  %s7 = inlined_call_operand.vmem [shape: f32[8,1], index: 7, kind: input, shape index: {}]
  %s8 = inlined_call_operand.vmem [shape: f32[8,72], index: 8, kind: input, shape index: {}]
  %s9 = inlined_call_operand.vmem [shape: f32[8,1], index: 9, kind: input, shape index: {}]
  %s10 = inlined_call_operand.vmem [shape: f32[8,1], index: 10, kind: input, shape index: {}]
  %s11 = inlined_call_operand.vmem [shape: f32[2,8,288], index: 11, kind: output, shape index: {}]
  %s12 = sld [smem:[#allocation0]]
  $region77: #{triple2dconv_pallas_impl.1} parent=0
    _
  %s14 = ssub.s32 1, %s12
  %s15 = scalar_select 0, %s14, %s12
  loop: start=0, step=1, limit=4
  $region2: #{triple2dconv_pallas_impl.1} parent=0 // loop_pre_header
    _
  $region3: #{triple2dconv_pallas_impl.1} parent=0 // loop_header
    %s17 = sphi 0, %s21
    %p18 = scmp.ge.s32.totalorder %s17, 4
    %s27 = sphi 0, %s29
    %s30 = sphi 0, %s27
    %s31 = sphi 0, %s30
    %s47 = sphi 0, %s31
    %s51 = sphi 0, %s51
    %s53 = sphi 0, %s51
    %s54 = sphi 0, %s53
    %s68 = sphi 0, %s54
    %s72 = sphi 0, %s72
    %s74 = sphi 0, %s72
    %s75 = sphi 0, %s74
    %s89 = sphi 0, %s75
    %s93 = sphi 0, %s93
    %s95 = sphi 0, %s93
    %s96 = sphi 0, %s95
    %s110 = sphi 0, %s96
    %s114 = sphi 0, %s114
    %s116 = sphi 0, %s114
    %s117 = sphi 0, %s116
    %s131 = sphi 0, %s117
    %s135 = sphi 0, %s135
    %s137 = sphi 0, %s135
    %s138 = sphi 0, %s137
    %s152 = sphi 0, %s138
    %s156 = sphi 0, %s156
    %s158 = sphi 0, %s156
    %s159 = sphi 0, %s158
    %s173 = sphi 0, %s159
    %s177 = sphi 0, %s177
    %s179 = sphi 0, %s177
    %s180 = sphi 0, %s179
    %s194 = sphi 0, %s180
    %s198 = sphi 0, %s198
    %s200 = sphi 0, %s198
    %s201 = sphi 0, %s200
    %s215 = sphi 0, %s201
    %s219 = sphi 0, %s219
    %s221 = sphi 0, %s219
    %s222 = sphi 0, %s221
    %s236 = sphi 0, %s222
    %s240 = sphi 0, %s240
    %s242 = sphi 0, %s240
    %s243 = sphi 0, %s242
    %s257 = sphi 0, %s243
    %s263 = sphi 0, %s265
    %s266 = sphi 0, %s263
    %s267 = sphi 0, %s266
    %s283 = sphi 0, %s267
  $region4: #{triple2dconv_pallas_impl.1} parent=0 // loop_header_branch
    %20 = sbr.rel (%p18) target = $region8
  $region5: #{triple2dconv_pallas_impl.1} parent=0 // loop_body
    %s22 = ssub.s32 %s17, 1
    %s23 = ssub.s32 %s17, 2
    %s24 = sadd.s32 %s17, 1
    %s25 = ssub.s32 %s17, %s24
    %p26 = scmp.eq.s32.totalorder %s25, 0
    %s28 = sadd.s32 %s27, 1
    %s29 = scalar_select %p26, %s27, %s28
    %p32 = pneg %p26
    %p33 = scmp.eq.s32.totalorder %s17, 1
    %p34 = por %p32, %p33
    %p35 = scmp.ne.s32.totalorder %s27, %s30
    %p36 = scmp.eq.s32.totalorder %s17, 0
    %p37 = por %p35, %p36
    %p38 = scmp.ne.s32.totalorder %s27, %s30
    %p39 = scmp.eq.s32.totalorder %s22, 1
    %p40 = por %p38, %p39
    %p41 = scmp.ne.s32.totalorder %s30, %s31
    %p42 = scmp.eq.s32.totalorder %s22, 0
    %p43 = por %p41, %p42
    %p44 = scmp.ne.s32.totalorder %s30, %s31
    %p45 = scmp.eq.s32.totalorder %s23, 1
    %p46 = por %p44, %p45
    %p48 = scmp.ne.s32.totalorder %s31, %s47
    %p49 = scmp.eq.s32.totalorder %s23, 0
    %p50 = por %p48, %p49
    %s52 = sadd.s32 %s51, 1
    %p55 = scmp.eq.s32.totalorder %s17, 1
    %p56 = scmp.ne.s32.totalorder %s51, %s53
    %p57 = scmp.eq.s32.totalorder %s17, 0
    %p58 = por %p56, %p57
    %p59 = scmp.ne.s32.totalorder %s51, %s53
    %p60 = scmp.eq.s32.totalorder %s22, 1
    %p61 = por %p59, %p60
    %p62 = scmp.ne.s32.totalorder %s53, %s54
    %p63 = scmp.eq.s32.totalorder %s22, 0
    %p64 = por %p62, %p63
    %p65 = scmp.ne.s32.totalorder %s53, %s54
    %p66 = scmp.eq.s32.totalorder %s23, 1
    %p67 = por %p65, %p66
    %p69 = scmp.ne.s32.totalorder %s54, %s68
    %p70 = scmp.eq.s32.totalorder %s23, 0
    %p71 = por %p69, %p70
    %s73 = sadd.s32 %s72, 1
    %p76 = scmp.eq.s32.totalorder %s17, 1
    %p77 = scmp.ne.s32.totalorder %s72, %s74
    %p78 = scmp.eq.s32.totalorder %s17, 0
    %p79 = por %p77, %p78
    %p80 = scmp.ne.s32.totalorder %s72, %s74
    %p81 = scmp.eq.s32.totalorder %s22, 1
    %p82 = por %p80, %p81
    %p83 = scmp.ne.s32.totalorder %s74, %s75
    %p84 = scmp.eq.s32.totalorder %s22, 0
    %p85 = por %p83, %p84
    %p86 = scmp.ne.s32.totalorder %s74, %s75
    %p87 = scmp.eq.s32.totalorder %s23, 1
    %p88 = por %p86, %p87
    %p90 = scmp.ne.s32.totalorder %s75, %s89
    %p91 = scmp.eq.s32.totalorder %s23, 0
    %p92 = por %p90, %p91
    %s94 = sadd.s32 %s93, 1
    %p97 = scmp.eq.s32.totalorder %s17, 1
    %p98 = scmp.ne.s32.totalorder %s93, %s95
    %p99 = scmp.eq.s32.totalorder %s17, 0
    %p100 = por %p98, %p99
    %p101 = scmp.ne.s32.totalorder %s93, %s95
    %p102 = scmp.eq.s32.totalorder %s22, 1
    %p103 = por %p101, %p102
    %p104 = scmp.ne.s32.totalorder %s95, %s96
    %p105 = scmp.eq.s32.totalorder %s22, 0
    %p106 = por %p104, %p105
    %p107 = scmp.ne.s32.totalorder %s95, %s96
    %p108 = scmp.eq.s32.totalorder %s23, 1
    %p109 = por %p107, %p108
    %p111 = scmp.ne.s32.totalorder %s96, %s110
    %p112 = scmp.eq.s32.totalorder %s23, 0
    %p113 = por %p111, %p112
    %s115 = sadd.s32 %s114, 1
    %p118 = scmp.eq.s32.totalorder %s17, 1
    %p119 = scmp.ne.s32.totalorder %s114, %s116
    %p120 = scmp.eq.s32.totalorder %s17, 0
    %p121 = por %p119, %p120
    %p122 = scmp.ne.s32.totalorder %s114, %s116
    %p123 = scmp.eq.s32.totalorder %s22, 1
    %p124 = por %p122, %p123
    %p125 = scmp.ne.s32.totalorder %s116, %s117
    %p126 = scmp.eq.s32.totalorder %s22, 0
    %p127 = por %p125, %p126
    %p128 = scmp.ne.s32.totalorder %s116, %s117
    %p129 = scmp.eq.s32.totalorder %s23, 1
    %p130 = por %p128, %p129
    %p132 = scmp.ne.s32.totalorder %s117, %s131
    %p133 = scmp.eq.s32.totalorder %s23, 0
    %p134 = por %p132, %p133
    %s136 = sadd.s32 %s135, 1
    %p139 = scmp.eq.s32.totalorder %s17, 1
    %p140 = scmp.ne.s32.totalorder %s135, %s137
    %p141 = scmp.eq.s32.totalorder %s17, 0
    %p142 = por %p140, %p141
    %p143 = scmp.ne.s32.totalorder %s135, %s137
    %p144 = scmp.eq.s32.totalorder %s22, 1
    %p145 = por %p143, %p144
    %p146 = scmp.ne.s32.totalorder %s137, %s138
    %p147 = scmp.eq.s32.totalorder %s22, 0
    %p148 = por %p146, %p147
    %p149 = scmp.ne.s32.totalorder %s137, %s138
    %p150 = scmp.eq.s32.totalorder %s23, 1
    %p151 = por %p149, %p150
    %p153 = scmp.ne.s32.totalorder %s138, %s152
    %p154 = scmp.eq.s32.totalorder %s23, 0
    %p155 = por %p153, %p154
    %s157 = sadd.s32 %s156, 1
    %p160 = scmp.eq.s32.totalorder %s17, 1
    %p161 = scmp.ne.s32.totalorder %s156, %s158
    %p162 = scmp.eq.s32.totalorder %s17, 0
    %p163 = por %p161, %p162
    %p164 = scmp.ne.s32.totalorder %s156, %s158
    %p165 = scmp.eq.s32.totalorder %s22, 1
    %p166 = por %p164, %p165
    %p167 = scmp.ne.s32.totalorder %s158, %s159
    %p168 = scmp.eq.s32.totalorder %s22, 0
    %p169 = por %p167, %p168
    %p170 = scmp.ne.s32.totalorder %s158, %s159
    %p171 = scmp.eq.s32.totalorder %s23, 1
    %p172 = por %p170, %p171
    %p174 = scmp.ne.s32.totalorder %s159, %s173
    %p175 = scmp.eq.s32.totalorder %s23, 0
    %p176 = por %p174, %p175
    %s178 = sadd.s32 %s177, 1
    %p181 = scmp.eq.s32.totalorder %s17, 1
    %p182 = scmp.ne.s32.totalorder %s177, %s179
    %p183 = scmp.eq.s32.totalorder %s17, 0
    %p184 = por %p182, %p183
    %p185 = scmp.ne.s32.totalorder %s177, %s179
    %p186 = scmp.eq.s32.totalorder %s22, 1
    %p187 = por %p185, %p186
    %p188 = scmp.ne.s32.totalorder %s179, %s180
    %p189 = scmp.eq.s32.totalorder %s22, 0
    %p190 = por %p188, %p189
    %p191 = scmp.ne.s32.totalorder %s179, %s180
    %p192 = scmp.eq.s32.totalorder %s23, 1
    %p193 = por %p191, %p192
    %p195 = scmp.ne.s32.totalorder %s180, %s194
    %p196 = scmp.eq.s32.totalorder %s23, 0
    %p197 = por %p195, %p196
    %s199 = sadd.s32 %s198, 1
    %p202 = scmp.eq.s32.totalorder %s17, 1
    %p203 = scmp.ne.s32.totalorder %s198, %s200
    %p204 = scmp.eq.s32.totalorder %s17, 0
    %p205 = por %p203, %p204
    %p206 = scmp.ne.s32.totalorder %s198, %s200
    %p207 = scmp.eq.s32.totalorder %s22, 1
    %p208 = por %p206, %p207
    %p209 = scmp.ne.s32.totalorder %s200, %s201
    %p210 = scmp.eq.s32.totalorder %s22, 0
    %p211 = por %p209, %p210
    %p212 = scmp.ne.s32.totalorder %s200, %s201
    %p213 = scmp.eq.s32.totalorder %s23, 1
    %p214 = por %p212, %p213
    %p216 = scmp.ne.s32.totalorder %s201, %s215
    %p217 = scmp.eq.s32.totalorder %s23, 0
    %p218 = por %p216, %p217
    %s220 = sadd.s32 %s219, 1
    %p223 = scmp.eq.s32.totalorder %s17, 1
    %p224 = scmp.ne.s32.totalorder %s219, %s221
    %p225 = scmp.eq.s32.totalorder %s17, 0
    %p226 = por %p224, %p225
    %p227 = scmp.ne.s32.totalorder %s219, %s221
    %p228 = scmp.eq.s32.totalorder %s22, 1
    %p229 = por %p227, %p228
    %p230 = scmp.ne.s32.totalorder %s221, %s222
    %p231 = scmp.eq.s32.totalorder %s22, 0
    %p232 = por %p230, %p231
    %p233 = scmp.ne.s32.totalorder %s221, %s222
    %p234 = scmp.eq.s32.totalorder %s23, 1
    %p235 = por %p233, %p234
    %p237 = scmp.ne.s32.totalorder %s222, %s236
    %p238 = scmp.eq.s32.totalorder %s23, 0
    %p239 = por %p237, %p238
    %s241 = sadd.s32 %s240, 1
    %p244 = scmp.eq.s32.totalorder %s17, 1
    %p245 = scmp.ne.s32.totalorder %s240, %s242
    %p246 = scmp.eq.s32.totalorder %s17, 0
    %p247 = por %p245, %p246
    %p248 = scmp.ne.s32.totalorder %s240, %s242
    %p249 = scmp.eq.s32.totalorder %s22, 1
    %p250 = por %p248, %p249
    %p251 = scmp.ne.s32.totalorder %s242, %s243
    %p252 = scmp.eq.s32.totalorder %s22, 0
    %p253 = por %p251, %p252
    %p254 = scmp.ne.s32.totalorder %s242, %s243
    %p255 = scmp.eq.s32.totalorder %s23, 1
    %p256 = por %p254, %p255
    %p258 = scmp.ne.s32.totalorder %s243, %s257
    %p259 = scmp.eq.s32.totalorder %s23, 0
    %p260 = por %p258, %p259
    %s261 = ssub.s32 %s17, %s24
    %p262 = scmp.eq.s32.totalorder %s261, 0
    %s264 = sadd.s32 %s263, 1
    %s265 = scalar_select %p262, %s263, %s264
    %p268 = pneg %p262
    %p269 = scmp.eq.s32.totalorder %s17, 1
    %p270 = por %p268, %p269
    %p271 = scmp.ne.s32.totalorder %s263, %s266
    %p272 = scmp.eq.s32.totalorder %s17, 0
    %p273 = por %p271, %p272
    %p274 = scmp.ne.s32.totalorder %s263, %s266
    %p275 = scmp.eq.s32.totalorder %s22, 1
    %p276 = por %p274, %p275
    %p277 = scmp.ne.s32.totalorder %s266, %s267
    %p278 = scmp.eq.s32.totalorder %s22, 0
    %p279 = por %p277, %p278
    %p280 = scmp.ne.s32.totalorder %s266, %s267
    %p281 = scmp.eq.s32.totalorder %s23, 1
    %p282 = por %p280, %p281
    %p284 = scmp.ne.s32.totalorder %s267, %s283
    %p285 = scmp.eq.s32.totalorder %s23, 0
    %p286 = por %p284, %p285
    %p287 = scmp.le.s32.totalorder 1, %s17
    %p288 = scmp.lt.s32.totalorder %s17, 3
    %p289 = pnand %p287, %p288
    %p290 = pneg %p289
    // Predicated region
    $region9: #{triple2dconv_pallas_impl.1} parent=5 // pred_check
      _
    $region10: #{triple2dconv_pallas_impl.1} parent=5 // pred_check_branch
      %292 = sbr.rel (%p289) target = $region12
    $region11: #{triple2dconv_pallas_impl.1} parent=5 // pred_region
      %s293 = ssub.s32 %s17, 1
      // Predicated region
      $region13: #{triple2dconv_pallas_impl.1} parent=11 // pred_check
        %p294 = pneg %p64
      $region14: #{triple2dconv_pallas_impl.1} parent=11 // pred_check_branch
        %296 = sbr.rel (%p294) target = $region16
      $region15: #{triple2dconv_pallas_impl.1} parent=11 // pred_region
        _
      $region16: #{triple2dconv_pallas_impl.1} parent=11 // pred_fallthru
        _
      // Predicated region
      $region17: #{triple2dconv_pallas_impl.1} parent=11 // pred_check
        %p297 = pneg %p85
      $region18: #{triple2dconv_pallas_impl.1} parent=11 // pred_check_branch
        %299 = sbr.rel (%p297) target = $region20
      $region19: #{triple2dconv_pallas_impl.1} parent=11 // pred_region
        _
      $region20: #{triple2dconv_pallas_impl.1} parent=11 // pred_fallthru
        _
      // Predicated region
      $region21: #{triple2dconv_pallas_impl.1} parent=11 // pred_check
        %p300 = pneg %p106
      $region22: #{triple2dconv_pallas_impl.1} parent=11 // pred_check_branch
        %302 = sbr.rel (%p300) target = $region24
      $region23: #{triple2dconv_pallas_impl.1} parent=11 // pred_region
        _
      $region24: #{triple2dconv_pallas_impl.1} parent=11 // pred_fallthru
        _
      // Predicated region
      $region25: #{triple2dconv_pallas_impl.1} parent=11 // pred_check
        %p303 = pneg %p127
      $region26: #{triple2dconv_pallas_impl.1} parent=11 // pred_check_branch
        %305 = sbr.rel (%p303) target = $region28
      $region27: #{triple2dconv_pallas_impl.1} parent=11 // pred_region
        _
      $region28: #{triple2dconv_pallas_impl.1} parent=11 // pred_fallthru
        _
      // Predicated region
      $region29: #{triple2dconv_pallas_impl.1} parent=11 // pred_check
        %p306 = pneg %p148
      $region30: #{triple2dconv_pallas_impl.1} parent=11 // pred_check_branch
        %308 = sbr.rel (%p306) target = $region32
      $region31: #{triple2dconv_pallas_impl.1} parent=11 // pred_region
        _
      $region32: #{triple2dconv_pallas_impl.1} parent=11 // pred_fallthru
        _
      // Predicated region
      $region33: #{triple2dconv_pallas_impl.1} parent=11 // pred_check
        %p309 = pneg %p169
      $region34: #{triple2dconv_pallas_impl.1} parent=11 // pred_check_branch
        %311 = sbr.rel (%p309) target = $region36
      $region35: #{triple2dconv_pallas_impl.1} parent=11 // pred_region
        _
      $region36: #{triple2dconv_pallas_impl.1} parent=11 // pred_fallthru
        _
      // Predicated region
      $region37: #{triple2dconv_pallas_impl.1} parent=11 // pred_check
        %p312 = pneg %p190
      $region38: #{triple2dconv_pallas_impl.1} parent=11 // pred_check_branch
        %314 = sbr.rel (%p312) target = $region40
      $region39: #{triple2dconv_pallas_impl.1} parent=11 // pred_region
        _
      $region40: #{triple2dconv_pallas_impl.1} parent=11 // pred_fallthru
        _
      // Predicated region
      $region41: #{triple2dconv_pallas_impl.1} parent=11 // pred_check
        %p315 = pneg %p211
      $region42: #{triple2dconv_pallas_impl.1} parent=11 // pred_check_branch
        %317 = sbr.rel (%p315) target = $region44
      $region43: #{triple2dconv_pallas_impl.1} parent=11 // pred_region
        _
      $region44: #{triple2dconv_pallas_impl.1} parent=11 // pred_fallthru
        _
      // Predicated region
      $region45: #{triple2dconv_pallas_impl.1} parent=11 // pred_check
        %p318 = pneg %p232
      $region46: #{triple2dconv_pallas_impl.1} parent=11 // pred_check_branch
        %320 = sbr.rel (%p318) target = $region48
      $region47: #{triple2dconv_pallas_impl.1} parent=11 // pred_region
        _
      $region48: #{triple2dconv_pallas_impl.1} parent=11 // pred_fallthru
        _
      // Predicated region
      $region49: #{triple2dconv_pallas_impl.1} parent=11 // pred_check
        %p321 = pneg %p253
      $region50: #{triple2dconv_pallas_impl.1} parent=11 // pred_check_branch
        %323 = sbr.rel (%p321) target = $region52
      $region51: #{triple2dconv_pallas_impl.1} parent=11 // pred_region
        _
      $region52: #{triple2dconv_pallas_impl.1} parent=11 // pred_fallthru
        _
    $region12: #{triple2dconv_pallas_impl.1} parent=5 // pred_fallthru
      _
    %p324 = scmp.lt.s32.totalorder %s17, 2
    // Predicated region
    $region53: #{triple2dconv_pallas_impl.1} parent=5 // pred_check
      %p325 = pneg %p324
    $region54: #{triple2dconv_pallas_impl.1} parent=5 // pred_check_branch
      %327 = sbr.rel (%p325) target = $region56
    $region55: #{triple2dconv_pallas_impl.1} parent=5 // pred_region
      // Predicated region
      $region57: #{triple2dconv_pallas_impl.1} parent=55 // pred_check
        %p328 = pneg %p37
      $region58: #{triple2dconv_pallas_impl.1} parent=55 // pred_check_branch
        %330 = sbr.rel (%p328) target = $region60
      $region59: #{triple2dconv_pallas_impl.1} parent=55 // pred_region
        %p331 = scmp.lt.s32.totalorder %s17, 1
        %s332 = scalar_select %p331, %s17, 1
        %s333 = smul.addr %s332, 3
        %s334 = smul.addr %s333, 4
        %s335 = scalar_lea.vmem %s0, %s334
      $region60: #{triple2dconv_pallas_impl.1} parent=55 // pred_fallthru
        _
    $region56: #{triple2dconv_pallas_impl.1} parent=5 // pred_fallthru
      _
    %p336 = scmp.le.s32.totalorder 1, %s17
    %p337 = scmp.lt.s32.totalorder %s17, 3
    %p338 = pnand %p336, %p337
    %p339 = pneg %p338
    // Predicated region
    $region61: #{triple2dconv_pallas_impl.1} parent=5 // pred_check
      _
    $region62: #{triple2dconv_pallas_impl.1} parent=5 // pred_check_branch
      %341 = sbr.rel (%p338) target = $region64
    $region63: #{triple2dconv_pallas_impl.1} parent=5 // pred_region
      %s342 = ssub.s32 %s17, 1
      %p343 = scmp.lt.s32.totalorder %s22, 1
      %s344 = scalar_select %p343, %s22, 1
      %s345 = smul.addr %s344, 3
      %s346 = smul.addr %s345, 4
      %s347 = scalar_lea.vmem %s0, %s346
      %p348 = pneg %p43
      %p349 = pneg %p40
      %p350 = pneg %p64
      %p351 = pneg %p61
      %p352 = pneg %p85
      %p353 = pneg %p82
      %p354 = pneg %p106
      %p355 = pneg %p103
      %p356 = pneg %p127
      %p357 = pneg %p124
      %p358 = pneg %p148
      %p359 = pneg %p145
      %p360 = pneg %p169
      %p361 = pneg %p166
      %p362 = pneg %p190
      %p363 = pneg %p187
      %p364 = pneg %p211
      %p365 = pneg %p208
      %p366 = pneg %p232
      %p367 = pneg %p229
      %p368 = pneg %p253
      %p369 = pneg %p250
      %p370 = pneg %p279
      %p371 = pneg %p276
      %p372 = scmp.lt.s32.totalorder %s22, 1
      %s373 = scalar_select %p372, %s22, 1
      %s374 = smul.addr %s373, 3
      %s375 = smul.addr %s374, 8
      %s376 = scalar_lea.vmem %s11, %s375
      %p377 = scmp.lt.s32.totalorder %s22, 1
      %s378 = scalar_select %p377, %s22, 1
      %s379 = smul.addr %s378, 3
      %s380 = smul.addr %s379, 4
      %s381 = scalar_lea.vmem %s0, %s380
      %p382 = scmp.lt.s32.totalorder %s22, 1
      %s383 = scalar_select %p382, %s22, 1
      %s384 = smul.addr %s383, 3
      %s385 = smul.addr %s384, 8
      %s386 = scalar_lea.vmem %s11, %s385
      %v387 = vld [vmem:[%s1] sm:$0x7]
      %388 = vst [vmem:[#allocation2] sm:$0xff] 0.0
      %389 = vst [vmem:[#allocation2 + $0x8] sm:$0xff] 0.0
      %vm390 = vcmask 703488
      %391 = vst.msk [vmem:[#allocation2 + $0x10] sm:$0xff] %vm390, 0.0
      %v392 = vld [vmem:[%s381] sm:$0xff]
      %v393 = vld [vmem:[%s381 + $0x8] sm:$0xf]
      %396 = vst [vmem:[#allocation1] ss:$2 sm:$0xff] %v392
      %s397 = scalar_lea.vmem [#allocation1], 16
      %398 = vst [vmem:[%s397] ss:$2 sm:$0xff] %v393
      %v399 = vld.sshfl [vmem:[#allocation1] sm:$0xff pattern:$0x75316420]
      %v400 = vld.sshfl [vmem:[#allocation1 + $0x8] sm:$0xff pattern:$0x75316420]
      %v401 = vld.sshfl [vmem:[#allocation1 + $0x10] sm:$0xff pattern:$0x75316420]
      %s405 = scalar_lea.vmem [#allocation1], 1
      %406 = vst [vmem:[%s405] ss:$2 sm:$0xff] %v392
      %s407 = scalar_lea.vmem [#allocation1], 17
      %408 = vst [vmem:[%s407] ss:$2 sm:$0xff] %v393
      %v409 = vld.sshfl [vmem:[#allocation1] sm:$0xff pattern:$0x75316420]
      %v410 = vld.sshfl [vmem:[#allocation1 + $0x8] sm:$0xff pattern:$0x75316420]
      %v411 = vld.sshfl [vmem:[#allocation1 + $0x10] sm:$0xff pattern:$0x75316420]
      %412 = vrot.lane.b32.xlu0 %v409, 127
      %v413 = vpop.permute.xlu0 %412
      %414 = vrot.lane.b32.xlu0 %v410, 127
      %v415 = vpop.permute.xlu0 %414
      %416 = vrot.lane.b32.xlu0 %v411, 127
      %v417 = vpop.permute.xlu0 %416
      %vm418 = vcmask 1039360
      %v419 = vsel %vm418, %v413, %v415
      %v420 = vsel %vm418, %v415, %v417
      %424 = vst [vmem:[#allocation1] ss:$2 sm:$0xff] %v392
      %s425 = scalar_lea.vmem [#allocation1], 16
      %426 = vst [vmem:[%s425] ss:$2 sm:$0xff] %v393
      %v427 = vld.sshfl [vmem:[#allocation1] sm:$0xff pattern:$0x75316420]
      %v428 = vld.sshfl [vmem:[#allocation1 + $0x8] sm:$0xff pattern:$0x75316420]
      %v429 = vld.sshfl [vmem:[#allocation1 + $0x10] sm:$0xff pattern:$0x75316420]
      %430 = vrot.lane.b32.xlu0 %v427, 126
      %v431 = vpop.permute.xlu0 %430
      %432 = vrot.lane.b32.xlu0 %v428, 126
      %v433 = vpop.permute.xlu0 %432
      %434 = vrot.lane.b32.xlu0 %v429, 126
      %v435 = vpop.permute.xlu0 %434
      %vm436 = vcmask 1031168
      %v437 = vsel %vm436, %v431, %v433
      %v438 = vsel %vm436, %v433, %v435
      %s442 = scalar_lea.vmem [#allocation1], 1
      %443 = vst [vmem:[%s442] ss:$2 sm:$0xff] %v392
      %s444 = scalar_lea.vmem [#allocation1], 17
      %445 = vst [vmem:[%s444] ss:$2 sm:$0xff] %v393
      %v446 = vld.sshfl [vmem:[#allocation1] sm:$0xff pattern:$0x75316420]
      %v447 = vld.sshfl [vmem:[#allocation1 + $0x8] sm:$0xff pattern:$0x75316420]
      %v448 = vld.sshfl [vmem:[#allocation1 + $0x10] sm:$0xff pattern:$0x75316420]
      %449 = vrot.lane.b32.xlu0 %v446, 110
      %v450 = vpop.permute.xlu0 %449
      %451 = vrot.lane.b32.xlu0 %v447, 110
      %v452 = vpop.permute.xlu0 %451
      %453 = vrot.lane.b32.xlu0 %v448, 110
      %v454 = vpop.permute.xlu0 %453
      %vm455 = vcmask 900096
      %v456 = vsel %vm455, %v450, %v452
      %v457 = vsel %vm455, %v452, %v454
      %461 = vst [vmem:[#allocation1] ss:$2 sm:$0xff] %v392
      %s462 = scalar_lea.vmem [#allocation1], 16
      %463 = vst [vmem:[%s462] ss:$2 sm:$0xff] %v393
      %v464 = vld.sshfl [vmem:[#allocation1] sm:$0xff pattern:$0x75316420]
      %v465 = vld.sshfl [vmem:[#allocation1 + $0x8] sm:$0xff pattern:$0x75316420]
      %v466 = vld.sshfl [vmem:[#allocation1 + $0x10] sm:$0xff pattern:$0x75316420]
      %467 = vrot.lane.b32.xlu0 %v464, 109
      %v468 = vpop.permute.xlu0 %467
      %469 = vrot.lane.b32.xlu0 %v465, 109
      %v470 = vpop.permute.xlu0 %469
      %471 = vrot.lane.b32.xlu0 %v466, 109
      %v472 = vpop.permute.xlu0 %471
      %vm473 = vcmask 891904
      %v474 = vsel %vm473, %v468, %v470
      %v475 = vsel %vm473, %v470, %v472
      %s479 = scalar_lea.vmem [#allocation1], 1
      %480 = vst [vmem:[%s479] ss:$2 sm:$0xff] %v392
      %s481 = scalar_lea.vmem [#allocation1], 17
      %482 = vst [vmem:[%s481] ss:$2 sm:$0xff] %v393
      %v483 = vld.sshfl [vmem:[#allocation1] sm:$0xff pattern:$0x75316420]
      %v484 = vld.sshfl [vmem:[#allocation1 + $0x8] sm:$0xff pattern:$0x75316420]
      %v485 = vld.sshfl [vmem:[#allocation1 + $0x10] sm:$0xff pattern:$0x75316420]
      %486 = vrot.lane.b32.xlu0 %v483, 108
      %v487 = vpop.permute.xlu0 %486
      %488 = vrot.lane.b32.xlu0 %v484, 108
      %v489 = vpop.permute.xlu0 %488
      %490 = vrot.lane.b32.xlu0 %v485, 108
      %v491 = vpop.permute.xlu0 %490
      %vm492 = vcmask 883712
      %v493 = vsel %vm492, %v487, %v489
      %v494 = vsel %vm492, %v489, %v491
      %498 = vst [vmem:[#allocation1] ss:$2 sm:$0xff] %v392
      %s499 = scalar_lea.vmem [#allocation1], 16
      %500 = vst [vmem:[%s499] ss:$2 sm:$0xff] %v393
      %v501 = vld.sshfl [vmem:[#allocation1] sm:$0xff pattern:$0x75316420]
      %v502 = vld.sshfl [vmem:[#allocation1 + $0x8] sm:$0xff pattern:$0x75316420]
      %v503 = vld.sshfl [vmem:[#allocation1 + $0x10] sm:$0xff pattern:$0x75316420]
      %504 = vrot.lane.b32.xlu0 %v501, 92
      %v505 = vpop.permute.xlu0 %504
      %506 = vrot.lane.b32.xlu0 %v502, 92
      %v507 = vpop.permute.xlu0 %506
      %508 = vrot.lane.b32.xlu0 %v503, 92
      %v509 = vpop.permute.xlu0 %508
      %vm510 = vcmask 752640
      %v511 = vsel %vm510, %v505, %v507
      %v512 = vsel %vm510, %v507, %v509
      %s516 = scalar_lea.vmem [#allocation1], 1
      %517 = vst [vmem:[%s516] ss:$2 sm:$0xff] %v392
      %s518 = scalar_lea.vmem [#allocation1], 17
      %519 = vst [vmem:[%s518] ss:$2 sm:$0xff] %v393
      %v520 = vld.sshfl [vmem:[#allocation1] sm:$0xff pattern:$0x75316420]
      %v521 = vld.sshfl [vmem:[#allocation1 + $0x8] sm:$0xff pattern:$0x75316420]
      %v522 = vld.sshfl [vmem:[#allocation1 + $0x10] sm:$0xff pattern:$0x75316420]
      %523 = vrot.lane.b32.xlu0 %v520, 91
      %v524 = vpop.permute.xlu0 %523
      %525 = vrot.lane.b32.xlu0 %v521, 91
      %v526 = vpop.permute.xlu0 %525
      %527 = vrot.lane.b32.xlu0 %v522, 91
      %v528 = vpop.permute.xlu0 %527
      %vm529 = vcmask 744448
      %v530 = vsel %vm529, %v524, %v526
      %v531 = vsel %vm529, %v526, %v528
      %535 = vst [vmem:[#allocation1] ss:$2 sm:$0xff] %v392
      %s536 = scalar_lea.vmem [#allocation1], 16
      %537 = vst [vmem:[%s536] ss:$2 sm:$0xff] %v393
      %v538 = vld.sshfl [vmem:[#allocation1] sm:$0xff pattern:$0x75316420]
      %v539 = vld.sshfl [vmem:[#allocation1 + $0x8] sm:$0xff pattern:$0x75316420]
      %v540 = vld.sshfl [vmem:[#allocation1 + $0x10] sm:$0xff pattern:$0x75316420]
      %541 = vrot.lane.b32.xlu0 %v538, 90
      %v542 = vpop.permute.xlu0 %541
      %543 = vrot.lane.b32.xlu0 %v539, 90
      %v544 = vpop.permute.xlu0 %543
      %545 = vrot.lane.b32.xlu0 %v540, 90
      %v546 = vpop.permute.xlu0 %545
      %vm547 = vcmask 736256
      %v548 = vsel %vm547, %v542, %v544
      %v549 = vsel %vm547, %v544, %v546
      %vm550 = vcmask 1043456
      %v551 = vsel %vm550, %v399, %v419
      %v552 = vsel %vm550, %v400, %v420
      %v553 = vsel %vm550, %v401, %v417
      %v554 = vsel %vm550, %v437, %v456
      %v555 = vsel %vm550, %v438, %v457
      %v556 = vsel %vm550, %v435, %v454
      %v557 = vsel %vm550, %v474, %v493
      %v558 = vsel %vm550, %v475, %v494
      %v559 = vsel %vm550, %v472, %v491
      %v560 = vsel %vm550, %v511, %v530
      %v561 = vsel %vm550, %v512, %v531
      %v562 = vsel %vm550, %v509, %v528
      %v563 = vld [vmem:[%s2] sm:$0xff]
      %vm564 = vcmask 293888
      %v566 = vsel %vm564, %v563, 0
      %v568 = vsel %vm550, %v548, 0
      %v570 = vsel %vm550, %v549, 0
      %v572 = vsel %vm550, %v546, 0
      %574 = vmatpush.msra.mxu0 0.0
      %575 = vmatpush.msra.mxu0 0.0
      %576 = vmatpush.msra.mxu0 0.0
      %577 = vmatpush.msra.mxu0 0.0
      %578 = vmatpush.msra.mxu0 0.0
      %579 = vmatpush.msra.mxu0 0.0
      %580 = vmatpush.msra.mxu0 0.0
      %581 = vmatpush.msra.mxu0 0.0
      %582 = vmatpush.msra.mxu0 0.0
      %583 = vmatpush.msra.mxu0 0.0
      %584 = vmatpush.msra.mxu0 0.0
      %585 = vmatpush.msra.mxu0 %v568
      %586 = vmatpush.msra.mxu0 %v560
      %587 = vmatpush.msra.mxu0 %v557
      %588 = vmatpush.msra.mxu0 %v554
      %589 = vmatpush.msra.mxu0 %v551
      %590 = vmatmul.f32.gmra.mxu0 %v566
      %v591 = vpop.f32.mrf.mxu0
      %v592 = vadd.f32 0.0, %v591
      %593 = vdwg.mxu0
      %594 = vmatpush.msra.mxu0 0.0
      %595 = vmatpush.msra.mxu0 0.0
      %596 = vmatpush.msra.mxu0 0.0
      %597 = vmatpush.msra.mxu0 0.0
      %598 = vmatpush.msra.mxu0 0.0
      %599 = vmatpush.msra.mxu0 0.0
      %600 = vmatpush.msra.mxu0 0.0
      %601 = vmatpush.msra.mxu0 0.0
      %602 = vmatpush.msra.mxu0 0.0
      %603 = vmatpush.msra.mxu0 0.0
      %604 = vmatpush.msra.mxu0 0.0
      %605 = vmatpush.msra.mxu0 %v570
      %606 = vmatpush.msra.mxu0 %v561
      %607 = vmatpush.msra.mxu0 %v558
      %608 = vmatpush.msra.mxu0 %v555
      %609 = vmatpush.msra.mxu0 %v552
      %610 = vmatmul.f32.gmra.mxu0 %v566
      %v611 = vpop.f32.mrf.mxu0
      %v612 = vadd.f32 0.0, %v611
      %613 = vdwg.mxu0
      %614 = vmatpush.msra.mxu0 0.0
      %615 = vmatpush.msra.mxu0 0.0
      %616 = vmatpush.msra.mxu0 0.0
      %617 = vmatpush.msra.mxu0 0.0
      %618 = vmatpush.msra.mxu0 0.0
      %619 = vmatpush.msra.mxu0 0.0
      %620 = vmatpush.msra.mxu0 0.0
      %621 = vmatpush.msra.mxu0 0.0
      %622 = vmatpush.msra.mxu0 0.0
      %623 = vmatpush.msra.mxu0 0.0
      %624 = vmatpush.msra.mxu0 0.0
      %625 = vmatpush.msra.mxu0 %v572
      %626 = vmatpush.msra.mxu0 %v562
      %627 = vmatpush.msra.mxu0 %v559
      %628 = vmatpush.msra.mxu0 %v556
      %629 = vmatpush.msra.mxu0 %v553
      %630 = vmatmul.f32.gmra.mxu0 %v566
      %v631 = vpop.f32.mrf.mxu0
      %v632 = vadd.f32 0.0, %v631
      %633 = vdwg.mxu0
      %v634 = vld [vmem:[%s3] sm:$0xff]
      %636 = vset.pattern.permute.xlu0 0
      %637 = vperm.xlu0 %636, %v634
      %v638 = vpop.permute.xlu0 %637
      %v640 = vmul.f32 %v592, %v638
      %v641 = vmul.f32 %v612, %v638
      %v642 = vmul.f32 %v632, %v638
      %v643 = vld [vmem:[%s4] sm:$0xff]
      %645 = vset.pattern.permute.xlu0 0
      %646 = vperm.xlu0 %645, %v643
      %v647 = vpop.permute.xlu0 %646
      %v649 = vadd.f32 %v640, %v647
      %v650 = vadd.f32 %v641, %v647
      %v651 = vadd.f32 %v642, %v647
      %v652 = vmax.f32 %v649, 0.0
      %v653 = vmax.f32 %v650, 0.0
      %v654 = vmax.f32 %v651, 0.0
      %v656 = vperm.slane %v387, 0
      %v657 = vperm.slane %v387, 1
      %v658 = vperm.slane %v387, 2
      %v662 = vmul.f32 %v652, %v656
      %v663 = vmul.f32 %v653, %v657
      %v664 = vmul.f32 %v654, %v658
      %668 = vrot.lane.b32.xlu0 %v662, 19
      %v669 = vpop.permute.xlu0 %668
      %670 = vrot.lane.b32.xlu0 %v663, 19
      %v671 = vpop.permute.xlu0 %670
      %672 = vrot.lane.b32.xlu0 %v664, 19
      %v673 = vpop.permute.xlu0 %672
      %vm674 = vcmask 154624
      %v675 = vsel %vm674, %v669, %v671
      %v676 = vsel %vm674, %v671, %v673
      %vm680 = vcmask 1047704
      %681 = vst.msk [vmem:[#allocation2] sm:$0xff] %vm680, %v669
      %682 = vst [vmem:[#allocation2 + $0x8] sm:$0xff] %v675
      %vm683 = vcmask 416768
      %684 = vst.msk [vmem:[#allocation2 + $0x10] sm:$0xff] %vm683, %v676
      %v685 = vld [vmem:[#allocation2] sm:$0xff]
      %v686 = vld [vmem:[#allocation2 + $0x8] sm:$0xff]
      %v687 = vld [vmem:[#allocation2 + $0x10] sm:$0xff]
      %691 = vrot.lane.b32.xlu0 %v685, 127
      %v692 = vpop.permute.xlu0 %691
      %693 = vrot.lane.b32.xlu0 %v686, 127
      %v694 = vpop.permute.xlu0 %693
      %695 = vrot.lane.b32.xlu0 %v687, 127
      %v696 = vpop.permute.xlu0 %695
      %v697 = vsel %vm418, %v692, %v694
      %v698 = vsel %vm418, %v694, %v696
      %702 = vrot.lane.b32.xlu0 %v685, 126
      %v703 = vpop.permute.xlu0 %702
      %704 = vrot.lane.b32.xlu0 %v686, 126
      %v705 = vpop.permute.xlu0 %704
      %706 = vrot.lane.b32.xlu0 %v687, 126
      %v707 = vpop.permute.xlu0 %706
      %v708 = vsel %vm436, %v703, %v705
      %v709 = vsel %vm436, %v705, %v707
      %713 = vrot.lane.b32.xlu0 %v685, 110
      %v714 = vpop.permute.xlu0 %713
      %715 = vrot.lane.b32.xlu0 %v686, 110
      %v716 = vpop.permute.xlu0 %715
      %717 = vrot.lane.b32.xlu0 %v687, 110
      %v718 = vpop.permute.xlu0 %717
      %v719 = vsel %vm455, %v714, %v716
      %v720 = vsel %vm455, %v716, %v718
      %724 = vrot.lane.b32.xlu0 %v685, 109
      %v725 = vpop.permute.xlu0 %724
      %726 = vrot.lane.b32.xlu0 %v686, 109
      %v727 = vpop.permute.xlu0 %726
      %728 = vrot.lane.b32.xlu0 %v687, 109
      %v729 = vpop.permute.xlu0 %728
      %v730 = vsel %vm473, %v725, %v727
      %v731 = vsel %vm473, %v727, %v729
      %735 = vrot.lane.b32.xlu0 %v685, 108
      %v736 = vpop.permute.xlu0 %735
      %737 = vrot.lane.b32.xlu0 %v686, 108
      %v738 = vpop.permute.xlu0 %737
      %739 = vrot.lane.b32.xlu0 %v687, 108
      %v740 = vpop.permute.xlu0 %739
      %v741 = vsel %vm492, %v736, %v738
      %v742 = vsel %vm492, %v738, %v740
      %746 = vrot.lane.b32.xlu0 %v685, 92
      %v747 = vpop.permute.xlu0 %746
      %748 = vrot.lane.b32.xlu0 %v686, 92
      %v749 = vpop.permute.xlu0 %748
      %750 = vrot.lane.b32.xlu0 %v687, 92
      %v751 = vpop.permute.xlu0 %750
      %v752 = vsel %vm510, %v747, %v749
      %v753 = vsel %vm510, %v749, %v751
      %757 = vrot.lane.b32.xlu0 %v685, 91
      %v758 = vpop.permute.xlu0 %757
      %759 = vrot.lane.b32.xlu0 %v686, 91
      %v760 = vpop.permute.xlu0 %759
      %761 = vrot.lane.b32.xlu0 %v687, 91
      %v762 = vpop.permute.xlu0 %761
      %v763 = vsel %vm529, %v758, %v760
      %v764 = vsel %vm529, %v760, %v762
      %768 = vrot.lane.b32.xlu0 %v685, 90
      %v769 = vpop.permute.xlu0 %768
      %770 = vrot.lane.b32.xlu0 %v686, 90
      %v771 = vpop.permute.xlu0 %770
      %772 = vrot.lane.b32.xlu0 %v687, 90
      %v773 = vpop.permute.xlu0 %772
      %v774 = vsel %vm547, %v769, %v771
      %v775 = vsel %vm547, %v771, %v773
      %v779 = vld [vmem:[%s5] sm:$0xff]
      %vm780 = vcmask 588800
      %v782 = vsel %vm780, %v779, 0
      %784 = vmatpush.msra.mxu0 0.0
      %785 = vmatpush.msra.mxu0 0.0
      %786 = vmatpush.msra.mxu0 0.0
      %787 = vmatpush.msra.mxu0 0.0
      %788 = vmatpush.msra.mxu0 0.0
      %789 = vmatpush.msra.mxu0 0.0
      %790 = vmatpush.msra.mxu0 0.0
      %791 = vmatpush.msra.mxu0 %v774
      %792 = vmatpush.msra.mxu0 %v763
      %793 = vmatpush.msra.mxu0 %v752
      %794 = vmatpush.msra.mxu0 %v741
      %795 = vmatpush.msra.mxu0 %v730
      %796 = vmatpush.msra.mxu0 %v719
      %797 = vmatpush.msra.mxu0 %v708
      %798 = vmatpush.msra.mxu0 %v697
      %799 = vmatpush.msra.mxu0 %v685
      %800 = vmatmul.f32.gmra.mxu0 %v782
      %v801 = vpop.f32.mrf.mxu0
      %v802 = vadd.f32 0.0, %v801
      %803 = vdwg.mxu0
      %804 = vmatpush.msra.mxu0 0.0
      %805 = vmatpush.msra.mxu0 0.0
      %806 = vmatpush.msra.mxu0 0.0
      %807 = vmatpush.msra.mxu0 0.0
      %808 = vmatpush.msra.mxu0 0.0
      %809 = vmatpush.msra.mxu0 0.0
      %810 = vmatpush.msra.mxu0 0.0
      %811 = vmatpush.msra.mxu0 %v775
      %812 = vmatpush.msra.mxu0 %v764
      %813 = vmatpush.msra.mxu0 %v753
      %814 = vmatpush.msra.mxu0 %v742
      %815 = vmatpush.msra.mxu0 %v731
      %816 = vmatpush.msra.mxu0 %v720
      %817 = vmatpush.msra.mxu0 %v709
      %818 = vmatpush.msra.mxu0 %v698
      %819 = vmatpush.msra.mxu0 %v686
      %820 = vmatmul.f32.gmra.mxu0 %v782
      %v821 = vpop.f32.mrf.mxu0
      %v822 = vadd.f32 0.0, %v821
      %823 = vdwg.mxu0
      %824 = vmatpush.msra.mxu0 0.0
      %825 = vmatpush.msra.mxu0 0.0
      %826 = vmatpush.msra.mxu0 0.0
      %827 = vmatpush.msra.mxu0 0.0
      %828 = vmatpush.msra.mxu0 0.0
      %829 = vmatpush.msra.mxu0 0.0
      %830 = vmatpush.msra.mxu0 0.0
      %831 = vmatpush.msra.mxu0 %v773
      %832 = vmatpush.msra.mxu0 %v762
      %833 = vmatpush.msra.mxu0 %v751
      %834 = vmatpush.msra.mxu0 %v740
      %835 = vmatpush.msra.mxu0 %v729
      %836 = vmatpush.msra.mxu0 %v718
      %837 = vmatpush.msra.mxu0 %v707
      %838 = vmatpush.msra.mxu0 %v696
      %839 = vmatpush.msra.mxu0 %v687
      %840 = vmatmul.f32.gmra.mxu0 %v782
      %v841 = vpop.f32.mrf.mxu0
      %v842 = vadd.f32 0.0, %v841
      %843 = vdwg.mxu0
      %v844 = vld [vmem:[%s6] sm:$0xff]
      %846 = vset.pattern.permute.xlu0 0
      %847 = vperm.xlu0 %846, %v844
      %v848 = vpop.permute.xlu0 %847
      %v850 = vmul.f32 %v802, %v848
      %v851 = vmul.f32 %v822, %v848
      %v852 = vmul.f32 %v842, %v848
      %v853 = vld [vmem:[%s7] sm:$0xff]
      %855 = vset.pattern.permute.xlu0 0
      %856 = vperm.xlu0 %855, %v853
      %v857 = vpop.permute.xlu0 %856
      %v859 = vadd.f32 %v850, %v857
      %v860 = vadd.f32 %v851, %v857
      %v861 = vadd.f32 %v852, %v857
      %v862 = vmax.f32 %v859, 0.0
      %v863 = vmax.f32 %v860, 0.0
      %v864 = vmax.f32 %v861, 0.0
      %v865 = vmul.f32 %v862, %v656
      %v866 = vmul.f32 %v863, %v657
      %v867 = vmul.f32 %v864, %v658
      %871 = vrot.lane.b32.xlu0 %v865, 19
      %v872 = vpop.permute.xlu0 %871
      %873 = vrot.lane.b32.xlu0 %v866, 19
      %v874 = vpop.permute.xlu0 %873
      %875 = vrot.lane.b32.xlu0 %v867, 19
      %v876 = vpop.permute.xlu0 %875
      %v877 = vsel %vm674, %v872, %v874
      %v878 = vsel %vm674, %v874, %v876
      %882 = vst.msk [vmem:[#allocation2] sm:$0xff] %vm680, %v872
      %883 = vst [vmem:[#allocation2 + $0x8] sm:$0xff] %v877
      %884 = vst.msk [vmem:[#allocation2 + $0x10] sm:$0xff] %vm683, %v878
      %v885 = vld [vmem:[#allocation2] sm:$0xff]
      %v886 = vld [vmem:[#allocation2 + $0x8] sm:$0xff]
      %v887 = vld [vmem:[#allocation2 + $0x10] sm:$0xff]
      %891 = vrot.lane.b32.xlu0 %v885, 127
      %v892 = vpop.permute.xlu0 %891
      %893 = vrot.lane.b32.xlu0 %v886, 127
      %v894 = vpop.permute.xlu0 %893
      %895 = vrot.lane.b32.xlu0 %v887, 127
      %v896 = vpop.permute.xlu0 %895
      %v897 = vsel %vm418, %v892, %v894
      %v898 = vsel %vm418, %v894, %v896
      %902 = vrot.lane.b32.xlu0 %v885, 126
      %v903 = vpop.permute.xlu0 %902
      %904 = vrot.lane.b32.xlu0 %v886, 126
      %v905 = vpop.permute.xlu0 %904
      %906 = vrot.lane.b32.xlu0 %v887, 126
      %v907 = vpop.permute.xlu0 %906
      %v908 = vsel %vm436, %v903, %v905
      %v909 = vsel %vm436, %v905, %v907
      %913 = vrot.lane.b32.xlu0 %v885, 110
      %v914 = vpop.permute.xlu0 %913
      %915 = vrot.lane.b32.xlu0 %v886, 110
      %v916 = vpop.permute.xlu0 %915
      %917 = vrot.lane.b32.xlu0 %v887, 110
      %v918 = vpop.permute.xlu0 %917
      %v919 = vsel %vm455, %v914, %v916
      %v920 = vsel %vm455, %v916, %v918
      %924 = vrot.lane.b32.xlu0 %v885, 109
      %v925 = vpop.permute.xlu0 %924
      %926 = vrot.lane.b32.xlu0 %v886, 109
      %v927 = vpop.permute.xlu0 %926
      %928 = vrot.lane.b32.xlu0 %v887, 109
      %v929 = vpop.permute.xlu0 %928
      %v930 = vsel %vm473, %v925, %v927
      %v931 = vsel %vm473, %v927, %v929
      %935 = vrot.lane.b32.xlu0 %v885, 108
      %v936 = vpop.permute.xlu0 %935
      %937 = vrot.lane.b32.xlu0 %v886, 108
      %v938 = vpop.permute.xlu0 %937
      %939 = vrot.lane.b32.xlu0 %v887, 108
      %v940 = vpop.permute.xlu0 %939
      %v941 = vsel %vm492, %v936, %v938
      %v942 = vsel %vm492, %v938, %v940
      %946 = vrot.lane.b32.xlu0 %v885, 92
      %v947 = vpop.permute.xlu0 %946
      %948 = vrot.lane.b32.xlu0 %v886, 92
      %v949 = vpop.permute.xlu0 %948
      %950 = vrot.lane.b32.xlu0 %v887, 92
      %v951 = vpop.permute.xlu0 %950
      %v952 = vsel %vm510, %v947, %v949
      %v953 = vsel %vm510, %v949, %v951
      %957 = vrot.lane.b32.xlu0 %v885, 91
      %v958 = vpop.permute.xlu0 %957
      %959 = vrot.lane.b32.xlu0 %v886, 91
      %v960 = vpop.permute.xlu0 %959
      %961 = vrot.lane.b32.xlu0 %v887, 91
      %v962 = vpop.permute.xlu0 %961
      %v963 = vsel %vm529, %v958, %v960
      %v964 = vsel %vm529, %v960, %v962
      %968 = vrot.lane.b32.xlu0 %v885, 90
      %v969 = vpop.permute.xlu0 %968
      %970 = vrot.lane.b32.xlu0 %v886, 90
      %v971 = vpop.permute.xlu0 %970
      %972 = vrot.lane.b32.xlu0 %v887, 90
      %v973 = vpop.permute.xlu0 %972
      %v974 = vsel %vm547, %v969, %v971
      %v975 = vsel %vm547, %v971, %v973
      %v979 = vld [vmem:[%s8] sm:$0xff]
      %v981 = vsel %vm780, %v979, 0
      %983 = vmatpush.msra.mxu0 0.0
      %984 = vmatpush.msra.mxu0 0.0
      %985 = vmatpush.msra.mxu0 0.0
      %986 = vmatpush.msra.mxu0 0.0
      %987 = vmatpush.msra.mxu0 0.0
      %988 = vmatpush.msra.mxu0 0.0
      %989 = vmatpush.msra.mxu0 0.0
      %990 = vmatpush.msra.mxu0 %v974
      %991 = vmatpush.msra.mxu0 %v963
      %992 = vmatpush.msra.mxu0 %v952
      %993 = vmatpush.msra.mxu0 %v941
      %994 = vmatpush.msra.mxu0 %v930
      %995 = vmatpush.msra.mxu0 %v919
      %996 = vmatpush.msra.mxu0 %v908
      %997 = vmatpush.msra.mxu0 %v897
      %998 = vmatpush.msra.mxu0 %v885
      %999 = vmatmul.f32.gmra.mxu0 %v981
      %v1000 = vpop.f32.mrf.mxu0
      %v1001 = vadd.f32 0.0, %v1000
      %1002 = vdwg.mxu0
      %1003 = vmatpush.msra.mxu0 0.0
      %1004 = vmatpush.msra.mxu0 0.0
      %1005 = vmatpush.msra.mxu0 0.0
      %1006 = vmatpush.msra.mxu0 0.0
      %1007 = vmatpush.msra.mxu0 0.0
      %1008 = vmatpush.msra.mxu0 0.0
      %1009 = vmatpush.msra.mxu0 0.0
      %1010 = vmatpush.msra.mxu0 %v975
      %1011 = vmatpush.msra.mxu0 %v964
      %1012 = vmatpush.msra.mxu0 %v953
      %1013 = vmatpush.msra.mxu0 %v942
      %1014 = vmatpush.msra.mxu0 %v931
      %1015 = vmatpush.msra.mxu0 %v920
      %1016 = vmatpush.msra.mxu0 %v909
      %1017 = vmatpush.msra.mxu0 %v898
      %1018 = vmatpush.msra.mxu0 %v886
      %1019 = vmatmul.f32.gmra.mxu0 %v981
      %v1020 = vpop.f32.mrf.mxu0
      %v1021 = vadd.f32 0.0, %v1020
      %1022 = vdwg.mxu0
      %1023 = vmatpush.msra.mxu0 0.0
      %1024 = vmatpush.msra.mxu0 0.0
      %1025 = vmatpush.msra.mxu0 0.0
      %1026 = vmatpush.msra.mxu0 0.0
      %1027 = vmatpush.msra.mxu0 0.0
      %1028 = vmatpush.msra.mxu0 0.0
      %1029 = vmatpush.msra.mxu0 0.0
      %1030 = vmatpush.msra.mxu0 %v973
      %1031 = vmatpush.msra.mxu0 %v962
      %1032 = vmatpush.msra.mxu0 %v951
      %1033 = vmatpush.msra.mxu0 %v940
      %1034 = vmatpush.msra.mxu0 %v929
      %1035 = vmatpush.msra.mxu0 %v918
      %1036 = vmatpush.msra.mxu0 %v907
      %1037 = vmatpush.msra.mxu0 %v896
      %1038 = vmatpush.msra.mxu0 %v887
      %1039 = vmatmul.f32.gmra.mxu0 %v981
      %v1040 = vpop.f32.mrf.mxu0
      %v1041 = vadd.f32 0.0, %v1040
      %1042 = vdwg.mxu0
      %v1043 = vld [vmem:[%s9] sm:$0xff]
      %1045 = vset.pattern.permute.xlu0 0
      %1046 = vperm.xlu0 %1045, %v1043
      %v1047 = vpop.permute.xlu0 %1046
      %v1049 = vmul.f32 %v1001, %v1047
      %v1050 = vmul.f32 %v1021, %v1047
      %v1051 = vmul.f32 %v1041, %v1047
      %v1052 = vld [vmem:[%s10] sm:$0xff]
      %1054 = vset.pattern.permute.xlu0 0
      %1055 = vperm.xlu0 %1054, %v1052
      %v1056 = vpop.permute.xlu0 %1055
      %v1058 = vadd.f32 %v1049, %v1056
      %v1059 = vadd.f32 %v1050, %v1056
      %v1060 = vadd.f32 %v1051, %v1056
      %v1061 = vmax.f32 %v1058, 0.0
      %v1062 = vmax.f32 %v1059, 0.0
      %v1063 = vmax.f32 %v1060, 0.0
      %1064 = vst [vmem:[%s386] sm:$0xff] %v1061
      %1065 = vst [vmem:[%s386 + $0x8] sm:$0xff] %v1062
      %vm1066 = vcmask 261120
      %1067 = vst.msk [vmem:[%s386 + $0x10] sm:$0xff] %vm1066, %v1063
      %p1068 = scmp.lt.s32.totalorder %s22, 1
      %s1069 = scalar_select %p1068, %s22, 1
      %s1070 = smul.addr %s1069, 3
      %s1071 = smul.addr %s1070, 8
      %s1072 = scalar_lea.vmem %s11, %s1071
      // Predicated region
      $region65: #{triple2dconv_pallas_impl.1} parent=63 // pred_check
        %p1073 = pneg %p276
      $region66: #{triple2dconv_pallas_impl.1} parent=63 // pred_check_branch
        %1075 = sbr.rel (%p1073) target = $region68
      $region67: #{triple2dconv_pallas_impl.1} parent=63 // pred_region
        _
      $region68: #{triple2dconv_pallas_impl.1} parent=63 // pred_fallthru
        _
    $region64: #{triple2dconv_pallas_impl.1} parent=5 // pred_fallthru
      _
    %p1076 = scmp.le.s32.totalorder 2, %s17
    // Predicated region
    $region69: #{triple2dconv_pallas_impl.1} parent=5 // pred_check
      %p1077 = pneg %p1076
    $region70: #{triple2dconv_pallas_impl.1} parent=5 // pred_check_branch
      %1079 = sbr.rel (%p1077) target = $region72
    $region71: #{triple2dconv_pallas_impl.1} parent=5 // pred_region
      %s1080 = ssub.s32 %s17, 2
      // Predicated region
      $region73: #{triple2dconv_pallas_impl.1} parent=71 // pred_check
        %p1081 = pneg %p282
      $region74: #{triple2dconv_pallas_impl.1} parent=71 // pred_check_branch
        %1083 = sbr.rel (%p1081) target = $region76
      $region75: #{triple2dconv_pallas_impl.1} parent=71 // pred_region
        %p1084 = scmp.lt.s32.totalorder %s23, 1
        %s1085 = scalar_select %p1084, %s23, 1
        %s1086 = smul.addr %s1085, 3
        %s1087 = smul.addr %s1086, 8
        %s1088 = scalar_lea.vmem %s11, %s1087
      $region76: #{triple2dconv_pallas_impl.1} parent=71 // pred_fallthru
        _
    $region72: #{triple2dconv_pallas_impl.1} parent=5 // pred_fallthru
      _
  $region6: #{triple2dconv_pallas_impl.1} parent=0 // loop_footer
    %s21 = sadd.s32 1, %s17
  $region7: #{triple2dconv_pallas_impl.1} parent=0 // loop_footer_branch
    %16 = sbr.rel target = $region3
  $region8: #{triple2dconv_pallas_impl.1} parent=0 // loop_exit
    _

</llo_original>
